<compile_context>
chip_gen: v5e
topology: v5e:2x2
jax: 0.10.0
libtpu: 0.0.40
codegen_flags: <defaults>
</compile_context>

<pallas_src>
import functools

import jax
import jax.numpy as jnp
from jax import lax
from jax.experimental import pallas as pl
from jax.experimental.pallas import tpu as pltpu


def _round_up(x, m):
    return ((x + m - 1) // m) * m


def _contrastive_loss_kernel(o1_ref, o2_ref, lab_ref, out_ref, *,
                             margin, eps, inv_batch,
                             valid_rows, valid_cols,
                             padded_rows, padded_cols,
                             tile_b, tiles_per_part):
    p = pl.program_id(0)   # megacore / partial-sum axis ("parallel")
    t = pl.program_id(1)   # batch-tile reduction axis ("arbitrary")

    # Zero the resident per-part accumulator block on the first reduction step.
    @pl.when(t == 0)
    def _():
        out_ref[...] = jnp.zeros_like(out_ref)

    # Cast AFTER the tile is in VMEM: HBM traffic stays in the native dtype.
    diff = o1_ref[...].astype(jnp.float32) - o2_ref[...].astype(jnp.float32) + eps

    # Mask lane padding (D -> padded_cols) so the +eps doesn't leak into the norm.
    if valid_cols != padded_cols:
        col_ids = lax.broadcasted_iota(jnp.int32, diff.shape, dimension=1)
        diff = jnp.where(col_ids < valid_cols, diff, 0.0)

    sq_sum = jnp.sum(diff * diff, axis=-1, keepdims=True)      # (tile_b, 1)
    d = jnp.sqrt(sq_sum)                                       # pairwise distance
    lab = lab_ref[...]                                         # (tile_b, 1) f32

    # (1 - label) * d^2  ==  (1 - label) * sq_sum   (saves a sqrt->square round trip)
    per_row = (1.0 - lab) * sq_sum + lab * jnp.square(jnp.maximum(margin - d, 0.0))

    # Mask batch-row padding (B -> padded_rows).
    if valid_rows != padded_rows:
        row0 = (p * tiles_per_part + t) * tile_b
        row_ids = row0 + lax.broadcasted_iota(jnp.int32, per_row.shape, dimension=0)
        per_row = jnp.where(row_ids < valid_rows, per_row, 0.0)

    # Accumulate this tile's sum; broadcast over the lane-aligned (8,128) block.
    out_ref[...] += jnp.sum(per_row)

    # Finalize: sum -> mean with a compile-time 1/B constant.
    @pl.when(t == tiles_per_part - 1)
    def _():
        out_ref[...] *= inv_batch


def contrastive_loss(output1, output2, label, margin=2.0, *,
                     num_parts=2, max_tile_b=512):
    """Pallas TPU implementation of ContrastiveLoss.forward."""
    assert output1.ndim == 2 and output1.shape == output2.shape
    B, D = output1.shape
    eps = 1e-6

    # ---- lane-align the feature dim (pad with zeros, masked in-kernel) ----
    d_pad = _round_up(D, 128)

    # ---- pick the batch tile: biggest that keeps the double-buffered
    #      2-input working set around <= 8 MiB (well inside scoped VMEM) ----
    itemsize = jnp.dtype(output1.dtype).itemsize
    budget = 8 * 1024 * 1024
    tile_b = budget // max(1, 4 * d_pad * itemsize)            # 2 inputs x 2 buffers
    tile_b = max(16, min(max_tile_b, tile_b))
    tile_b = min(tile_b, _round_up(pl.cdiv(B, num_parts), 16)) # don't exceed per-part work
    tile_b = _round_up(tile_b, 16)

    total_tiles = pl.cdiv(B, tile_b)
    tiles_per_part = pl.cdiv(total_tiles, num_parts)
    b_pad = num_parts * tiles_per_part * tile_b

    def _pad2(x, rows, cols):
        pr, pc = rows - x.shape[0], cols - x.shape[1]
        if pr or pc:
            x = jnp.pad(x, ((0, pr), (0, pc)))
        return x

    # Keep the native dtype of the embeddings (no wrapper upcast).
    o1 = _pad2(output1, b_pad, d_pad)
    o2 = _pad2(output2, b_pad, d_pad)
    lab2d = _pad2(label.reshape(B, 1).astype(jnp.float32), b_pad, 1)

    kernel = functools.partial(
        _contrastive_loss_kernel,
        margin=float(margin), eps=eps, inv_batch=1.0 / B,
        valid_rows=B, valid_cols=D,
        padded_rows=b_pad, padded_cols=d_pad,
        tile_b=tile_b, tiles_per_part=tiles_per_part)

    out = pl.pallas_call(
        kernel,
        out_shape=jax.ShapeDtypeStruct((num_parts * 8, 128), jnp.float32),
        grid=(num_parts, tiles_per_part),
        in_specs=[
            pl.BlockSpec((tile_b, d_pad), lambda p, t: (p * tiles_per_part + t, 0)),
            pl.BlockSpec((tile_b, d_pad), lambda p, t: (p * tiles_per_part + t, 0)),
            pl.BlockSpec((tile_b, 1), lambda p, t: (p * tiles_per_part + t, 0)),
        ],
        out_specs=pl.BlockSpec((8, 128), lambda p, t: (p, 0)),
        compiler_params=pltpu.CompilerParams(
            dimension_semantics=("parallel", "arbitrary"),
            vmem_limit_bytes=32 * 1024 * 1024,
        ),
    )(o1, o2, lab2d)

    # Each part's partial already carries the 1/B factor; just add them.
    return jnp.sum(out[::8, 0])


def _reference(output1, output2, label, margin=2.0, eps=1e-6):
    # Pure-JAX reference mirroring the PyTorch forward, for verification.
    d = jnp.sqrt(jnp.sum((output1 - output2 + eps) ** 2, axis=-1))
    return jnp.mean((1.0 - label) * d**2 + label * jnp.maximum(margin - d, 0.0) ** 2)


if __name__ == "__main__":
    key = jax.random.PRNGKey(0)
    k1, k2, k3 = jax.random.split(key, 3)

    B, D = 8, 32  # small siamese embedding batch
    output1 = jax.random.normal(k1, (B, D), dtype=jnp.float32)
    output2 = jax.random.normal(k2, (B, D), dtype=jnp.float32)
    label = jax.random.bernoulli(k3, p=0.5, shape=(B,)).astype(jnp.float32)

    loss = contrastive_loss(output1, output2, label, margin=2.0)
    loss = jax.block_until_ready(loss)

    ref = _reference(output1, output2, label, margin=2.0)
    assert jnp.allclose(loss, ref, rtol=1e-5, atol=1e-5), (loss, ref)

    print("KERNEL_OK")
</pallas_src>

<mosaic_0001>
module attributes {stable_mosaic.version = 11 : i64} {
  func.func @_contrastive_loss_kernel(%arg0: i32, %arg1: i32, %arg2: memref<16x128xf32, #tpu.memory_space<vmem>>, %arg3: memref<16x128xf32, #tpu.memory_space<vmem>>, %arg4: memref<16x1xf32, #tpu.memory_space<vmem>>, %arg5: memref<8x128xf32, #tpu.memory_space<vmem>>) attributes {dimension_semantics = [#tpu.dimension_semantics<parallel>, #tpu.dimension_semantics<arbitrary>], iteration_bounds = array<i64: 2, 1>, scalar_prefetch = 0 : i64, scratch_operands = 0 : i64, tpu.core_type = #tpu.core_type<tc>, window_params = [{transform_indices = @transform_0, window_bounds = array<i64: 16, 128>}, {transform_indices = @transform_1, window_bounds = array<i64: 16, 128>}, {transform_indices = @transform_2, window_bounds = array<i64: 16, 1>}, {transform_indices = @transform_3, window_bounds = array<i64: 8, 128>}]} {
    %c0_i32 = arith.constant 0 : i32
    %0 = arith.cmpi eq, %arg1, %c0_i32 : i32
    %1 = arith.extui %0 : i1 to i32
    %c0_i32_0 = arith.constant 0 : i32
    %2 = arith.cmpi ne, %1, %c0_i32_0 : i32
    scf.if %2 {
      %cst_19 = arith.constant 0.000000e+00 : f32
      %49 = vector.broadcast %cst_19 : f32 to vector<8x128xf32>
      %c0_20 = arith.constant 0 : index
      %c0_21 = arith.constant 0 : index
      %50 = vector.load %arg5[%c0_20, %c0_21] : memref<8x128xf32, #tpu.memory_space<vmem>>, vector<8x128xf32>
      tpu.vector_store %arg5[%c0_20, %c0_21], %49 {strides = array<i32>} : memref<8x128xf32, #tpu.memory_space<vmem>>, vector<8x128xf32>,
    } else {
    }
    %c0 = arith.constant 0 : index
    %c0_1 = arith.constant 0 : index
    %3 = vector.load %arg2[%c0, %c0_1] : memref<16x128xf32, #tpu.memory_space<vmem>>, vector<16x128xf32>
    %c0_2 = arith.constant 0 : index
    %c0_3 = arith.constant 0 : index
    %4 = vector.load %arg3[%c0_2, %c0_3] : memref<16x128xf32, #tpu.memory_space<vmem>>, vector<16x128xf32>
    %5 = arith.subf %3, %4 : vector<16x128xf32>
    %cst = arith.constant 9.99999997E-7 : f32
    %6 = vector.broadcast %cst : f32 to vector<16x128xf32>
    %7 = arith.addf %5, %6 : vector<16x128xf32>
    %8 = tpu.iota {dimensions = array<i32: 1>} : vector<16x128xi32>
    %c32_i32 = arith.constant 32 : i32
    %9 = vector.broadcast %c32_i32 : i32 to vector<16x128xi32>
    %10 = arith.cmpi slt, %8, %9 : vector<16x128xi32>
    %cst_4 = arith.constant 0.000000e+00 : f32
    %11 = vector.broadcast %cst_4 : f32 to vector<16x128xf32>
    %12 = arith.select %10, %7, %11 : vector<16x128xi1>, vector<16x128xf32>
    %13 = arith.mulf %12, %12 : vector<16x128xf32>
    %cst_5 = arith.constant dense<0.000000e+00> : vector<16xf32>
    %14 = vector.multi_reduction <add>, %13, %cst_5 [1] : vector<16x128xf32> to vector<16xf32>
    %15 = vector.shape_cast %14 : vector<16xf32> to vector<16x1xf32>
    %16 = math.sqrt %15 : vector<16x1xf32>
    %c0_6 = arith.constant 0 : index
    %c0_7 = arith.constant 0 : index
    %17 = vector.load %arg4[%c0_6, %c0_7] : memref<16x1xf32, #tpu.memory_space<vmem>>, vector<16x1xf32>
    %cst_8 = arith.constant 1.000000e+00 : f32
    %18 = vector.broadcast %cst_8 : f32 to vector<16x1xf32>
    %19 = arith.subf %18, %17 : vector<16x1xf32>
    %20 = arith.mulf %19, %15 : vector<16x1xf32>
    %cst_9 = arith.constant 2.000000e+00 : f32
    %21 = vector.broadcast %cst_9 : f32 to vector<16x1xf32>
    %22 = arith.subf %21, %16 : vector<16x1xf32>
    %cst_10 = arith.constant 0.000000e+00 : f32
    %23 = vector.broadcast %cst_10 : f32 to vector<16x1xf32>
    %24 = arith.maximumf %22, %23 : vector<16x1xf32>
    %25 = arith.mulf %24, %24 : vector<16x1xf32>
    %26 = arith.mulf %17, %25 : vector<16x1xf32>
    %27 = arith.addf %20, %26 : vector<16x1xf32>
    %c1_i32 = arith.constant 1 : i32
    %28 = arith.muli %arg0, %c1_i32 : i32
    %29 = arith.addi %28, %arg1 : i32
    %c16_i32 = arith.constant 16 : i32
    %30 = arith.muli %29, %c16_i32 : i32
    %31 = tpu.iota {dimensions = array<i32: 0>} : vector<16x1xi32>
    %32 = vector.broadcast %30 : i32 to vector<16x1xi32>
    %33 = arith.addi %32, %31 : vector<16x1xi32>
    %c8_i32 = arith.constant 8 : i32
    %34 = vector.broadcast %c8_i32 : i32 to vector<16x1xi32>
    %35 = arith.cmpi slt, %33, %34 : vector<16x1xi32>
    %cst_11 = arith.constant 0.000000e+00 : f32
    %36 = vector.broadcast %cst_11 : f32 to vector<16x1xf32>
    %37 = arith.select %35, %27, %36 : vector<16x1xi1>, vector<16x1xf32>
    %c0_12 = arith.constant 0 : index
    %c0_13 = arith.constant 0 : index
    %38 = vector.load %arg5[%c0_12, %c0_13] : memref<8x128xf32, #tpu.memory_space<vmem>>, vector<8x128xf32>
    %39 = vector.shape_cast %37 : vector<16x1xf32> to vector<1x16x1xf32>
    %cst_14 = arith.constant dense<0.000000e+00> : vector<1xf32>
    %40 = vector.multi_reduction <add>, %39, %cst_14 [1, 2] : vector<1x16x1xf32> to vector<1xf32>
    %41 = vector.shape_cast %40 : vector<1xf32> to vector<1x1x1xf32>
    %42 = vector.extract %41[0, 0, 0] : f32 from vector<1x1x1xf32>
    %43 = vector.broadcast %42 : f32 to vector<8x128xf32>
    %44 = arith.addf %38, %43 : vector<8x128xf32>
    %c0_15 = arith.constant 0 : index
    %c0_16 = arith.constant 0 : index
    %45 = vector.load %arg5[%c0_15, %c0_16] : memref<8x128xf32, #tpu.memory_space<vmem>>, vector<8x128xf32>
    tpu.vector_store %arg5[%c0_15, %c0_16], %44 {strides = array<i32>} : memref<8x128xf32, #tpu.memory_space<vmem>>, vector<8x128xf32>,
    %c0_i32_17 = arith.constant 0 : i32
    %46 = arith.cmpi eq, %arg1, %c0_i32_17 : i32
    %47 = arith.extui %46 : i1 to i32
    %c0_i32_18 = arith.constant 0 : i32
    %48 = arith.cmpi ne, %47, %c0_i32_18 : i32
    scf.if %48 {
      %c0_19 = arith.constant 0 : index
      %c0_20 = arith.constant 0 : index
      %49 = vector.load %arg5[%c0_19, %c0_20] : memref<8x128xf32, #tpu.memory_space<vmem>>, vector<8x128xf32>
      %cst_21 = arith.constant 1.250000e-01 : f32
      %50 = vector.broadcast %cst_21 : f32 to vector<8x128xf32>
      %51 = arith.mulf %49, %50 : vector<8x128xf32>
      %c0_22 = arith.constant 0 : index
      %c0_23 = arith.constant 0 : index
      %52 = vector.load %arg5[%c0_22, %c0_23] : memref<8x128xf32, #tpu.memory_space<vmem>>, vector<8x128xf32>
      tpu.vector_store %arg5[%c0_22, %c0_23], %51 {strides = array<i32>} : memref<8x128xf32, #tpu.memory_space<vmem>>, vector<8x128xf32>,
    } else {
    }
    return
  }
  func.func @transform_0(%arg0: i32, %arg1: i32) -> (i32, i32) {
    %c1_i32 = arith.constant 1 : i32
    %0 = arith.muli %arg0, %c1_i32 : i32
    %1 = arith.addi %0, %arg1 : i32
    %c0_i32 = arith.constant 0 : i32
    %c0_i32_0 = arith.constant 0 : i32
    return %1, %c0_i32 : i32, i32
  }
  func.func @transform_1(%arg0: i32, %arg1: i32) -> (i32, i32) {
    %c1_i32 = arith.constant 1 : i32
    %0 = arith.muli %arg0, %c1_i32 : i32
    %1 = arith.addi %0, %arg1 : i32
    %c0_i32 = arith.constant 0 : i32
    %c0_i32_0 = arith.constant 0 : i32
    return %1, %c0_i32 : i32, i32
  }
  func.func @transform_2(%arg0: i32, %arg1: i32) -> (i32, i32) {
    %c1_i32 = arith.constant 1 : i32
    %0 = arith.muli %arg0, %c1_i32 : i32
    %1 = arith.addi %0, %arg1 : i32
    %c0_i32 = arith.constant 0 : i32
    %c0_i32_0 = arith.constant 0 : i32
    return %1, %c0_i32 : i32, i32
  }
  func.func @transform_3(%arg0: i32, %arg1: i32) -> (i32, i32) {
    %c0_i32 = arith.constant 0 : i32
    %c0_i32_0 = arith.constant 0 : i32
    return %arg0, %c0_i32 : i32, i32
  }
}

</mosaic_0001>

<llo_original>
// kernel: tpu_custom_call.1
$region0: #{tpu_custom_call.1}
  #allocation0 [shape = 'u32[]', space=smem, size = 0x4, offset = 0x4, fixed_abs, tag = 'smem constant byte address 0x4 - core index']
  #allocation1 [shape = 'u32[72,128]{1,0:T(1,128)}', space=vmem, size = 0x9000, scoped, tag = 'internal scratch']
  %s0 = inlined_call_operand.vmem [shape: f32[32,128], index: 0, kind: input, shape index: {}]
  %s1 = inlined_call_operand.hbm [shape: f32[32,128], index: 1, kind: input, shape index: {}]
  %s2 = inlined_call_operand.vmem [shape: f32[32,1], index: 2, kind: input, shape index: {}]
  %s3 = inlined_call_operand.hbm [shape: f32[16,128], index: 3, kind: output, shape index: {}]
  %s4 = sld [smem:[#allocation0]]
  $region57: #{tpu_custom_call.1} parent=0
    _
  %s6 = ssub.s32 1, %s4
  %s7 = scalar_select 0, %s6, %s4
  $region1: #{tpu_custom_call.1} parent=0
    #allocation2 [shape = 'u8[16384]{0}', space=vmem, size = 0x4000, scoped, tag = 'input window, operand 1']
    #allocation3 [shape = 's32[2]{0}', space=sflag, size = 0x8, scoped, tag = 'scoped memory for tpu_custom_call.1']
    #allocation4 [shape = 's32[2]{0}', space=sflag, size = 0x8, scoped, tag = 'scoped memory for tpu_custom_call.1']
    #allocation5 [shape = 'u8[8192]{0}', space=vmem, size = 0x2000, scoped, tag = 'output window, operand 0']
    %8 = vsyncpa [#allocation3], 0
    %s9 = scalar_lea.sflag [#allocation3], 1
    %10 = vsyncpa %s9, 0
    %11 = vsyncpa [#allocation4], 0
    %s12 = scalar_lea.sflag [#allocation4], 1
    %13 = vsyncpa %s12, 0
    loop: start=0, step=1, limit=4
    $region2: #{tpu_custom_call.1} parent=1 // loop_pre_header
      _
    $region3: #{tpu_custom_call.1} parent=1 // loop_header
      %s15 = sphi 0, %s19
      %p16 = scmp.ge.s32.totalorder %s15, 4
      %s22 = sphi 0, %s34
      %s23 = sphi 0, %s30
      %s24 = sphi 0, %s22
      %s25 = sphi 0, %s23
      %s26 = sphi 0, %s24
      %s27 = sphi 0, %s25
      %s39 = sphi 0, %s41
      %s42 = sphi 0, %s39
      %s43 = sphi 0, %s42
      %s59 = sphi 0, %s43
      %s67 = sphi 0, %s69
      %s70 = sphi 0, %s67
      %s71 = sphi 0, %s70
      %s87 = sphi 0, %s71
      %s95 = sphi 0, %s97
      %s98 = sphi 0, %s95
      %s99 = sphi 0, %s98
      %s115 = sphi 0, %s99
      %s121 = sphi 0, %s123
      %s124 = sphi 0, %s121
      %s125 = sphi 0, %s124
      %s141 = sphi 0, %s125
    $region4: #{tpu_custom_call.1} parent=1 // loop_header_branch
      %18 = sbr.rel (%p16) target = $region8
    $region5: #{tpu_custom_call.1} parent=1 // loop_body
      %s20 = ssub.s32 %s15, 1
      %s21 = ssub.s32 %s15, 2
      %s28 = sadd.s32 1, %s23
      %p29 = scmp.ge.s32.totalorder %s28, 1
      %s30 = scalar_select %p29, 0, %s28
      %s31 = sadd.s32 1, %s22
      %s32 = scalar_select %p29, %s31, %s22
      %p33 = scmp.ge.s32.totalorder %s32, 2
      %s34 = scalar_select %p33, 0, %s32
      %s35 = sadd.s32 %s22, %s23
      %s36 = sadd.s32 %s34, %s30
      %s37 = ssub.s32 %s35, %s36
      %p38 = scmp.eq.s32.totalorder %s37, 0
      %s40 = sadd.s32 %s39, 1
      %s41 = scalar_select %p38, %s39, %s40
      %p44 = pneg %p38
      %p45 = scmp.eq.s32.totalorder %s15, 1
      %p46 = por %p44, %p45
      %p47 = scmp.ne.s32.totalorder %s39, %s42
      %p48 = scmp.eq.s32.totalorder %s15, 0
      %p49 = por %p47, %p48
      %p50 = scmp.ne.s32.totalorder %s39, %s42
      %p51 = scmp.eq.s32.totalorder %s20, 1
      %p52 = por %p50, %p51
      %p53 = scmp.ne.s32.totalorder %s42, %s43
      %p54 = scmp.eq.s32.totalorder %s20, 0
      %p55 = por %p53, %p54
      %p56 = scmp.ne.s32.totalorder %s42, %s43
      %p57 = scmp.eq.s32.totalorder %s21, 1
      %p58 = por %p56, %p57
      %p60 = scmp.ne.s32.totalorder %s43, %s59
      %p61 = scmp.eq.s32.totalorder %s21, 0
      %p62 = por %p60, %p61
      %s63 = sadd.s32 %s22, %s23
      %s64 = sadd.s32 %s34, %s30
      %s65 = ssub.s32 %s63, %s64
      %p66 = scmp.eq.s32.totalorder %s65, 0
      %s68 = sadd.s32 %s67, 1
      %s69 = scalar_select %p66, %s67, %s68
      %p72 = pneg %p66
      %p73 = scmp.eq.s32.totalorder %s15, 1
      %p74 = por %p72, %p73
      %p75 = scmp.ne.s32.totalorder %s67, %s70
      %p76 = scmp.eq.s32.totalorder %s15, 0
      %p77 = por %p75, %p76
      %p78 = scmp.ne.s32.totalorder %s67, %s70
      %p79 = scmp.eq.s32.totalorder %s20, 1
      %p80 = por %p78, %p79
      %p81 = scmp.ne.s32.totalorder %s70, %s71
      %p82 = scmp.eq.s32.totalorder %s20, 0
      %p83 = por %p81, %p82
      %p84 = scmp.ne.s32.totalorder %s70, %s71
      %p85 = scmp.eq.s32.totalorder %s21, 1
      %p86 = por %p84, %p85
      %p88 = scmp.ne.s32.totalorder %s71, %s87
      %p89 = scmp.eq.s32.totalorder %s21, 0
      %p90 = por %p88, %p89
      %s91 = sadd.s32 %s22, %s23
      %s92 = sadd.s32 %s34, %s30
      %s93 = ssub.s32 %s91, %s92
      %p94 = scmp.eq.s32.totalorder %s93, 0
      %s96 = sadd.s32 %s95, 1
      %s97 = scalar_select %p94, %s95, %s96
      %p100 = pneg %p94
      %p101 = scmp.eq.s32.totalorder %s15, 1
      %p102 = por %p100, %p101
      %p103 = scmp.ne.s32.totalorder %s95, %s98
      %p104 = scmp.eq.s32.totalorder %s15, 0
      %p105 = por %p103, %p104
      %p106 = scmp.ne.s32.totalorder %s95, %s98
      %p107 = scmp.eq.s32.totalorder %s20, 1
      %p108 = por %p106, %p107
      %p109 = scmp.ne.s32.totalorder %s98, %s99
      %p110 = scmp.eq.s32.totalorder %s20, 0
      %p111 = por %p109, %p110
      %p112 = scmp.ne.s32.totalorder %s98, %s99
      %p113 = scmp.eq.s32.totalorder %s21, 1
      %p114 = por %p112, %p113
      %p116 = scmp.ne.s32.totalorder %s99, %s115
      %p117 = scmp.eq.s32.totalorder %s21, 0
      %p118 = por %p116, %p117
      %s119 = ssub.s32 %s22, %s34
      %p120 = scmp.eq.s32.totalorder %s119, 0
      %s122 = sadd.s32 %s121, 1
      %s123 = scalar_select %p120, %s121, %s122
      %p126 = pneg %p120
      %p127 = scmp.eq.s32.totalorder %s15, 1
      %p128 = por %p126, %p127
      %p129 = scmp.ne.s32.totalorder %s121, %s124
      %p130 = scmp.eq.s32.totalorder %s15, 0
      %p131 = por %p129, %p130
      %p132 = scmp.ne.s32.totalorder %s121, %s124
      %p133 = scmp.eq.s32.totalorder %s20, 1
      %p134 = por %p132, %p133
      %p135 = scmp.ne.s32.totalorder %s124, %s125
      %p136 = scmp.eq.s32.totalorder %s20, 0
      %p137 = por %p135, %p136
      %p138 = scmp.ne.s32.totalorder %s124, %s125
      %p139 = scmp.eq.s32.totalorder %s21, 1
      %p140 = por %p138, %p139
      %p142 = scmp.ne.s32.totalorder %s125, %s141
      %p143 = scmp.eq.s32.totalorder %s21, 0
      %p144 = por %p142, %p143
      %p145 = scmp.le.s32.totalorder 1, %s15
      %p146 = scmp.lt.s32.totalorder %s15, 3
      %p147 = pnand %p145, %p146
      %p148 = pneg %p147
      // Predicated region
      $region9: #{tpu_custom_call.1} parent=5 // pred_check
        _
      $region10: #{tpu_custom_call.1} parent=5 // pred_check_branch
        %150 = sbr.rel (%p147) target = $region12
      $region11: #{tpu_custom_call.1} parent=5 // pred_region
        %s151 = ssub.s32 %s15, 1
      $region12: #{tpu_custom_call.1} parent=5 // pred_fallthru
        _
      %p152 = scmp.lt.s32.totalorder %s15, 2
      // Predicated region
      $region13: #{tpu_custom_call.1} parent=5 // pred_check
        %p153 = pneg %p152
      $region14: #{tpu_custom_call.1} parent=5 // pred_check_branch
        %155 = sbr.rel (%p153) target = $region16
      $region15: #{tpu_custom_call.1} parent=5 // pred_region
        // Predicated region
        $region17: #{tpu_custom_call.1} parent=15 // pred_check
          %p156 = pneg %p49
        $region18: #{tpu_custom_call.1} parent=15 // pred_check_branch
          %158 = sbr.rel (%p156) target = $region20
        $region19: #{tpu_custom_call.1} parent=15 // pred_region
          %s159 = sadd.s32 %s22, %s23
          %s160 = smul.u32 2, %s159
          %p161 = scmp.lt.s32.totalorder %s160, 3
          %s162 = scalar_select %p161, %s160, 3
          %s163 = smul.addr %s162, 8
          %s164 = scalar_lea.vmem %s0, %s163
          %s165 = sadd.s32 %s22, %s23
          %s166 = smul.u32 2, %s165
        $region20: #{tpu_custom_call.1} parent=15 // pred_fallthru
          _
        // Predicated region
        $region21: #{tpu_custom_call.1} parent=15 // pred_check
          %p167 = pneg %p77
        $region22: #{tpu_custom_call.1} parent=15 // pred_check_branch
          %169 = sbr.rel (%p167) target = $region24
        $region23: #{tpu_custom_call.1} parent=15 // pred_region
          %s170 = sand.u32 %s67, 1
          %s171 = scalar_lea.sflag [#allocation3], %s170
          %s172 = sand.u32 %s67, 1
          %s173 = smul.addr %s172, 16
          %s174 = scalar_lea.vmem [#allocation2], %s173
          %s175 = sadd.s32 %s22, %s23
          %s176 = smul.u32 2, %s175
          %178 = vsyncadd %s171, 0
          %s179 = smul.addr %s176, 8
          %s180 = scalar_lea.hbm %s1, %s179
          %s181 = sshll.u32 %s180, 4
          %s182 = int_to_ptr.hbm [resolvable:$true] %s181
          %s183 = sshll.u32 %s174, 4
          %s184 = int_to_ptr.vmem [resolvable:$true] %s183
          %189 = dma.hbm_to_vmem [thread:$0]  %s182, 256, %s184, %s171, 128, 128, 8
        $region24: #{tpu_custom_call.1} parent=15 // pred_fallthru
          _
        // Predicated region
        $region25: #{tpu_custom_call.1} parent=15 // pred_check
          %p190 = pneg %p105
        $region26: #{tpu_custom_call.1} parent=15 // pred_check_branch
          %192 = sbr.rel (%p190) target = $region28
        $region27: #{tpu_custom_call.1} parent=15 // pred_region
          %s193 = sadd.s32 %s22, %s23
          %s194 = smul.u32 2, %s193
          %p195 = scmp.lt.s32.totalorder %s194, 3
          %s196 = scalar_select %p195, %s194, 3
          %s197 = smul.addr %s196, 8
          %s198 = scalar_lea.vmem %s2, %s197
          %s199 = sadd.s32 %s22, %s23
          %s200 = smul.u32 2, %s199
        $region28: #{tpu_custom_call.1} parent=15 // pred_fallthru
          _
      $region16: #{tpu_custom_call.1} parent=5 // pred_fallthru
        _
      %p201 = scmp.le.s32.totalorder 1, %s15
      %p202 = scmp.lt.s32.totalorder %s15, 3
      %p203 = pnand %p201, %p202
      %p204 = pneg %p203
      // Predicated region
      $region29: #{tpu_custom_call.1} parent=5 // pred_check
        _
      $region30: #{tpu_custom_call.1} parent=5 // pred_check_branch
        %206 = sbr.rel (%p203) target = $region32
      $region31: #{tpu_custom_call.1} parent=5 // pred_region
        %s207 = ssub.s32 %s15, 1
        %s208 = sand.u32 %s70, 1
        %s209 = scalar_lea.sflag [#allocation3], %s208
        %s210 = sand.u32 %s70, 1
        %s211 = smul.addr %s210, 16
        %s212 = scalar_lea.vmem [#allocation2], %s211
        // Predicated region
        $region33: #{tpu_custom_call.1} parent=31 // pred_check
          %p213 = pneg %p83
        $region34: #{tpu_custom_call.1} parent=31 // pred_check_branch
          %215 = sbr.rel (%p213) target = $region36
        $region35: #{tpu_custom_call.1} parent=31 // pred_region
          %217 = dma.done %s209, 256
        $region36: #{tpu_custom_call.1} parent=31 // pred_fallthru
          _
        %s218 = sadd.s32 %s24, %s25
        %s219 = smul.u32 2, %s218
        %p220 = scmp.lt.s32.totalorder %s219, 3
        %s221 = scalar_select %p220, %s219, 3
        %s222 = smul.addr %s221, 8
        %s223 = scalar_lea.vmem %s0, %s222
        %p224 = pneg %p55
        %p225 = pneg %p52
        %s226 = sand.u32 %s70, 1
        %s227 = scalar_lea.sflag [#allocation3], %s226
        %s228 = sand.u32 %s70, 1
        %s229 = smul.addr %s228, 16
        %s230 = scalar_lea.vmem [#allocation2], %s229
        %p231 = pneg %p83
        %p232 = pneg %p80
        %s233 = sadd.s32 %s24, %s25
        %s234 = smul.u32 2, %s233
        %p235 = scmp.lt.s32.totalorder %s234, 3
        %s236 = scalar_select %p235, %s234, 3
        %s237 = smul.addr %s236, 8
        %s238 = scalar_lea.vmem %s2, %s237
        %p239 = pneg %p111
        %p240 = pneg %p108
        %p241 = pneg %p137
        %p242 = pneg %p134
        %s243 = sand.u32 %s124, 1
        %s244 = scalar_lea.sflag [#allocation4], %s243
        %s245 = sand.u32 %s124, 1
        %s246 = smul.addr %s245, 8
        %s247 = scalar_lea.vmem [#allocation5], %s246
        %s248 = sadd.s32 %s24, %s25
        %s249 = smul.u32 2, %s248
        %p250 = scmp.lt.s32.totalorder %s249, 3
        %s251 = scalar_select %p250, %s249, 3
        %s252 = smul.addr %s251, 8
        %s253 = scalar_lea.vmem %s0, %s252
        %s254 = sadd.s32 %s24, %s25
        %s255 = smul.u32 2, %s254
        %s256 = sadd.s32 %s24, %s25
        %s257 = smul.u32 2, %s256
        %s258 = sadd.s32 %s24, %s25
        %s259 = smul.u32 2, %s258
        %p260 = scmp.lt.s32.totalorder %s259, 3
        %s261 = scalar_select %p260, %s259, 3
        %s262 = smul.addr %s261, 8
        %s263 = scalar_lea.vmem %s2, %s262
        %s264 = sadd.s32 %s24, %s25
        %s265 = smul.u32 2, %s264
        %p266 = scmp.eq.s32.totalorder %s25, 0
        // Predicated region
        $region37: #{tpu_custom_call.1} parent=31 // pred_check
          %p267 = pneg %p266
        $region38: #{tpu_custom_call.1} parent=31 // pred_check_branch
          %269 = sbr.rel (%p267) target = $region40
        $region39: #{tpu_custom_call.1} parent=31 // pred_region
          %270 = vst [vmem:[%s247] sm:$0xff] 0.0
        $region40: #{tpu_custom_call.1} parent=31 // pred_fallthru
          _
        %v271 = vld [vmem:[%s253] sm:$0xff]
        %v272 = vld [vmem:[%s253 + $0x8] sm:$0xff]
        %v273 = vld [vmem:[%s212] sm:$0xff]
        %v274 = vld [vmem:[%s212 + $0x8] sm:$0xff]
        %v275 = vsub.f32 %v271, %v273
        %v276 = vsub.f32 %v272, %v274
        %v277 = vadd.f32 %v275, 1e-06
        %v278 = vadd.f32 %v276, 1e-06
        %v279 = vlaneseq
        %v280 = vand.u32 %v279, 127
        %vm281 = vcmp.lt.s32.totalorder %v280, 32
        %v282 = vsel %vm281, %v277, 0.0
        %v283 = vsel %vm281, %v278, 0.0
        %v284 = vmul.f32 %v282, %v282
        %v285 = vmul.f32 %v283, %v283
        %286 = vadd.xlane.f32.xlu0 %v284
        %v287 = vpop.xlane.xlu0 %286
        %288 = vadd.xlane.f32.xlu0 %v285
        %v289 = vpop.xlane.xlu0 %288
        %v290 = vrsqrt.pop %v287
        %v291 = vmul.f32 %v290, %v287
        %v292 = vmul.f32 %v291, %v290
        %v293 = vmul.f32 0.5, %v292
        %v294 = vsub.f32 1.5, %v293
        %v295 = vmul.f32 %v290, %v294
        %v296 = vmul.f32 %v287, %v295
        %vm297 = vcmp.eq.f32.partialorder %v287, inf
        %v298 = vsel %vm297, %v287, %v296
        %vm299 = vcmp.eq.f32.partialorder %v287, 0.0
        %v300 = vand.u32 %v287, 2147483648
        %v301 = vsel %vm299, %v300, %v298
        %v302 = vrsqrt.pop %v289
        %v303 = vmul.f32 %v302, %v289
        %v304 = vmul.f32 %v303, %v302
        %v305 = vmul.f32 0.5, %v304
        %v306 = vsub.f32 1.5, %v305
        %v307 = vmul.f32 %v302, %v306
        %v308 = vmul.f32 %v289, %v307
        %vm309 = vcmp.eq.f32.partialorder %v289, inf
        %v310 = vsel %vm309, %v289, %v308
        %vm311 = vcmp.eq.f32.partialorder %v289, 0.0
        %v312 = vand.u32 %v289, 2147483648
        %v313 = vsel %vm311, %v312, %v310
        %v314 = vld [vmem:[%s263] sm:$0xff]
        %v315 = vld [vmem:[%s263 + $0x8] sm:$0xff]
        %v316 = vsub.f32 1.0, %v314
        %v317 = vsub.f32 1.0, %v315
        %v318 = vmul.f32 %v316, %v287
        %v319 = vmul.f32 %v317, %v289
        %v320 = vsub.f32 2.0, %v301
        %v321 = vsub.f32 2.0, %v313
        %v322 = vmax.f32 %v320, 0.0
        %v323 = vmax.f32 %v321, 0.0
        %v324 = vmul.f32 %v322, %v322
        %v325 = vmul.f32 %v323, %v323
        %v326 = vmul.f32 %v314, %v324
        %v327 = vmul.f32 %v315, %v325
        %v328 = vadd.f32 %v318, %v326
        %v329 = vadd.f32 %v319, %v327
        %s330 = sadd.s32 %s24, %s25
        %s331 = smul.u32 %s330, 16
        %v332 = vlaneseq
        %v333 = vshrl.u32 %v332, 7
        %v334 = vadd.s32 %v333, 8
        %v335 = vstv %s331
        %v336 = vadd.s32 %v335, %v333
        %v337 = vadd.s32 %v335, %v334
        %vm338 = vcmp.lt.s32.totalorder %v336, 8
        %vm339 = vcmp.lt.s32.totalorder %v337, 8
        %v340 = vsel %vm338, %v328, 0.0
        %v341 = vsel %vm339, %v329, 0.0
        %v342 = vld [vmem:[%s247] sm:$0xff]
        %vm343 = vcmask 7168
        %v344 = vsel %vm343, %v340, 0.0
        %v345 = vsel %vm343, %v341, 0.0
        %v346 = vadd.f32 %v344, %v345
        %347 = vadd.xlane.f32.xlu0 %v346
        %v348 = vpop.xlane.xlu0 %347
        %v349 = vrot.slane %v348, 4
        %v350 = vadd.f32 %v348, %v349
        %v351 = vrot.slane %v350, 2
        %v352 = vadd.f32 %v350, %v351
        %v353 = vrot.slane %v352, 1
        %v354 = vadd.f32 %v352, %v353
        %s355 = vtos %v354
        %v356 = vstv %s355
        %v357 = vadd.f32 %v342, %v356
        %358 = vst [vmem:[%s247] sm:$0xff] %v357
        // Predicated region
        $region41: #{tpu_custom_call.1} parent=31 // pred_check
          %p359 = pneg %p266
        $region42: #{tpu_custom_call.1} parent=31 // pred_check_branch
          %361 = sbr.rel (%p359) target = $region44
        $region43: #{tpu_custom_call.1} parent=31 // pred_region
          %v362 = vld [vmem:[%s247] sm:$0xff]
          %v363 = vmul.f32 %v362, 0.125
          %364 = vst [vmem:[%s247] sm:$0xff] %v363
        $region44: #{tpu_custom_call.1} parent=31 // pred_fallthru
          _
        %s365 = sand.u32 %s124, 1
        %s366 = scalar_lea.sflag [#allocation4], %s365
        %s367 = sand.u32 %s124, 1
        %s368 = smul.addr %s367, 8
        %s369 = scalar_lea.vmem [#allocation5], %s368
        // Predicated region
        $region45: #{tpu_custom_call.1} parent=31 // pred_check
          %p370 = pneg %p134
        $region46: #{tpu_custom_call.1} parent=31 // pred_check_branch
          %372 = sbr.rel (%p370) target = $region48
        $region47: #{tpu_custom_call.1} parent=31 // pred_region
          %374 = vsyncadd %s366, 0
          %s375 = smul.addr %s24, 8
          %s376 = scalar_lea.hbm %s3, %s375
          %s378 = sshll.u32 %s369, 4
          %s379 = int_to_ptr.vmem [resolvable:$true] %s378
          %s380 = sshll.u32 %s376, 4
          %s381 = int_to_ptr.hbm [resolvable:$true] %s380
          %383 = dma.vmem_to_hbm [thread:$0]  %s379, 128, %s381, %s366
        $region48: #{tpu_custom_call.1} parent=31 // pred_fallthru
          _
      $region32: #{tpu_custom_call.1} parent=5 // pred_fallthru
        _
      %p384 = scmp.le.s32.totalorder 2, %s15
      // Predicated region
      $region49: #{tpu_custom_call.1} parent=5 // pred_check
        %p385 = pneg %p384
      $region50: #{tpu_custom_call.1} parent=5 // pred_check_branch
        %387 = sbr.rel (%p385) target = $region52
      $region51: #{tpu_custom_call.1} parent=5 // pred_region
        %s388 = ssub.s32 %s15, 2
        // Predicated region
        $region53: #{tpu_custom_call.1} parent=51 // pred_check
          %p389 = pneg %p140
        $region54: #{tpu_custom_call.1} parent=51 // pred_check_branch
          %391 = sbr.rel (%p389) target = $region56
        $region55: #{tpu_custom_call.1} parent=51 // pred_region
          %s392 = sand.u32 %s125, 1
          %s393 = scalar_lea.sflag [#allocation4], %s392
          %s394 = sand.u32 %s125, 1
          %s395 = smul.addr %s394, 8
          %s396 = scalar_lea.vmem [#allocation5], %s395
          %398 = dma.done %s393, 128
        $region56: #{tpu_custom_call.1} parent=51 // pred_fallthru
          _
      $region52: #{tpu_custom_call.1} parent=5 // pred_fallthru
        _
    $region6: #{tpu_custom_call.1} parent=1 // loop_footer
      %s19 = sadd.s32 1, %s15
    $region7: #{tpu_custom_call.1} parent=1 // loop_footer_branch
      %14 = sbr.rel target = $region3
    $region8: #{tpu_custom_call.1} parent=1 // loop_exit
      _
    %399 = vsyncpa [#allocation3], 1
    %s400 = scalar_lea.sflag [#allocation3], 1
    %401 = vsyncpa %s400, 1
    %402 = vsyncpa [#allocation4], 1
    %s403 = scalar_lea.sflag [#allocation4], 1
    %404 = vsyncpa %s403, 1

</llo_original>
